<compile_context>
chip_gen: v5e
topology: v5e:2x2
jax: 0.10.0
libtpu: 0.0.40
codegen_flags: <defaults>
</compile_context>

<pallas_src>
import math

import jax
import jax.numpy as jnp
from jax.experimental import pallas as pl
from jax.experimental.pallas import tpu as pltpu


def _gcn_layer_kernel(adj_ref, dinv_ref, feat_all_ref, feat_ref,
                      w1_ref, w2_ref, b_ref, o_ref):
    # adj_ref:      (tm, Np)  row tile of the (dense) in-adjacency
    # dinv_ref:     (tm, 1)   1 / in_degree for this row tile (0 for isolated nodes)
    # feat_all_ref: (Np, F)   full feature matrix (resident, constant index map)
    # feat_ref:     (tm, F)   row tile of features (the "self" half of the concat)
    # w1_ref:       (F, M)    first F rows of W^T  (acts on aggregated features)
    # w2_ref:       (F, M)    last  F rows of W^T  (acts on raw features)
    # b_ref:        (1, M)
    # o_ref:        (tm, M)

    # Mean aggregation over in-neighbours: (A_tile @ X) * 1/deg   (MXU + VPU)
    agg = jnp.dot(adj_ref[...], feat_all_ref[...],
                  preferred_element_type=jnp.float32)
    agg = agg * dinv_ref[...]

    # Fused concat + linear:  cat([agg, feat], 1) @ W  ==  agg @ W1 + feat @ W2
    y = jnp.dot(agg, w1_ref[...], preferred_element_type=jnp.float32)
    y = y + jnp.dot(feat_ref[...], w2_ref[...],
                    preferred_element_type=jnp.float32)
    y = y + b_ref[...]
    y = jnp.maximum(y, 0.0)                      # ReLU (f32 epilogue, then cast)
    o_ref[...] = y.astype(o_ref.dtype)


def gcn_layer_forward(adj, features, w_t, bias, *, tm=128):
    """Fused GCNLayer forward.

    adj:      [N, N] float, adj[v, u] = 1 if edge u -> v (in-adjacency).
    features: [N, F]
    w_t:      [2F, M]  (transpose of nn.Linear.weight), rows 0..F-1 hit the
              aggregated features, rows F..2F-1 hit the raw features.
    bias:     [M]
    """
    n, f = features.shape
    two_f, m = w_t.shape
    assert two_f == 2 * f, "weight must map 2*in_feats -> out_feats"

    # Row tile: as large as possible (>=128 on real shapes), clamp for tiny graphs.
    if n <= tm:
        tm_eff, n_pad = n, n
    else:
        tm_eff = tm
        n_pad = -(-n // tm_eff) * tm_eff

    # Zero-pad node dimension so every row tile is full (padded rows have deg=0).
    if n_pad != n:
        pad = n_pad - n
        adj = jnp.pad(adj, ((0, pad), (0, pad)))
        features = jnp.pad(features, ((0, pad), (0, 0)))

    deg = adj.sum(axis=1, keepdims=True)
    dinv = jnp.where(deg > 0, 1.0 / deg, 0.0).astype(jnp.float32)  # [Np, 1]

    w1 = w_t[:f]                      # [F, M]
    w2 = w_t[f:]                      # [F, M]
    b2d = bias.reshape(1, m)

    grid = (n_pad // tm_eff,)

    flops = 2 * n_pad * n_pad * f + 2 * (2 * n_pad * f * m)
    bytes_accessed = 4 * (n_pad * n_pad + 2 * n_pad * f + n_pad
                          + 2 * f * m + m + n_pad * m)

    out = pl.pallas_call(
        _gcn_layer_kernel,
        out_shape=jax.ShapeDtypeStruct((n_pad, m), features.dtype),
        grid=grid,
        in_specs=[
            pl.BlockSpec((tm_eff, n_pad), lambda i: (i, 0)),   # adjacency row tile
            pl.BlockSpec((tm_eff, 1), lambda i: (i, 0)),       # 1/deg row tile
            pl.BlockSpec((n_pad, f), lambda i: (0, 0)),        # full features (resident)
            pl.BlockSpec((tm_eff, f), lambda i: (i, 0)),       # feature row tile
            pl.BlockSpec((f, m), lambda i: (0, 0)),            # W1 (constant, tiny)
            pl.BlockSpec((f, m), lambda i: (0, 0)),            # W2 (constant, tiny)
            pl.BlockSpec((1, m), lambda i: (0, 0)),            # bias
        ],
        out_specs=pl.BlockSpec((tm_eff, m), lambda i: (i, 0)),
        compiler_params=pltpu.CompilerParams(
            # single grid axis over independent row tiles -> sharded across
            # TensorCores on multi-TC chips (v7x), free elsewhere.
            dimension_semantics=("parallel",)),
        cost_estimate=pl.CostEstimate(flops=flops, transcendentals=0,
                                      bytes_accessed=bytes_accessed),
    )(adj, dinv, features, features, w1, w2, b2d)

    return out[:n]


def init_gcn_layer_params(key, in_feats, out_feats):
    """Mimic nn.Linear(2*in_feats, out_feats) default init, stored transposed."""
    kw, kb = jax.random.split(key)
    fan_in = 2 * in_feats
    bound = 1.0 / math.sqrt(fan_in)
    w_t = jax.random.uniform(kw, (fan_in, out_feats), jnp.float32, -bound, bound)
    b = jax.random.uniform(kb, (out_feats,), jnp.float32, -bound, bound)
    return w_t, b


if __name__ == "__main__":
    key = jax.random.PRNGKey(0)
    k_adj, k_feat, k_par = jax.random.split(key, 3)

    num_nodes = 256        # multiple of the 128-row tile -> 2 parallel grid steps
    in_feats = 16
    out_feats = 128        # lane-dense output (multiple of 128 lanes)

    # Random sparse-ish directed graph as a dense in-adjacency matrix.
    adj = (jax.random.uniform(k_adj, (num_nodes, num_nodes)) < 0.05).astype(jnp.float32)
    features = jax.random.normal(k_feat, (num_nodes, in_feats), jnp.float32)
    w_t, b = init_gcn_layer_params(k_par, in_feats, out_feats)

    out = gcn_layer_forward(adj, features, w_t, b, tm=128)
    out = jax.block_until_ready(out)

    # Pure-JAX reference of the same forward.
    deg = adj.sum(axis=1, keepdims=True)
    dinv = jnp.where(deg > 0, 1.0 / deg, 0.0)
    h_in = jnp.dot(adj, features, precision=jax.lax.Precision.HIGHEST) * dinv
    x_cat = jnp.concatenate([h_in, features], axis=1)
    ref = jnp.maximum(
        jnp.dot(x_cat, w_t, precision=jax.lax.Precision.HIGHEST) + b, 0.0)

    assert out.shape == (num_nodes, out_feats)
    assert bool(jnp.allclose(out, ref, rtol=2e-2, atol=2e-2)), "mismatch vs reference"
    print("KERNEL_OK")
</pallas_src>

<mosaic_0001>
module attributes {stable_mosaic.version = 11 : i64} {
  func.func @_gcn_layer_kernel(%arg0: i32, %arg1: memref<128x256xf32, #tpu.memory_space<vmem>>, %arg2: memref<128x1xf32, #tpu.memory_space<vmem>>, %arg3: memref<256x16xf32, #tpu.memory_space<vmem>>, %arg4: memref<128x16xf32, #tpu.memory_space<vmem>>, %arg5: memref<16x128xf32, #tpu.memory_space<vmem>>, %arg6: memref<16x128xf32, #tpu.memory_space<vmem>>, %arg7: memref<1x128xf32, #tpu.memory_space<vmem>>, %arg8: memref<128x128xf32, #tpu.memory_space<vmem>>) attributes {dimension_semantics = [#tpu.dimension_semantics<parallel>], iteration_bounds = array<i64: 2>, scalar_prefetch = 0 : i64, scratch_operands = 0 : i64, tpu.core_type = #tpu.core_type<tc>, window_params = [{transform_indices = @transform_0, window_bounds = array<i64: 128, 256>}, {transform_indices = @transform_1, window_bounds = array<i64: 128, 1>}, {pipeline_mode = #tpu.pipeline_mode<synchronous>, transform_indices = @transform_2, window_bounds = array<i64: 256, 16>}, {transform_indices = @transform_3, window_bounds = array<i64: 128, 16>}, {pipeline_mode = #tpu.pipeline_mode<synchronous>, transform_indices = @transform_4, window_bounds = array<i64: 16, 128>}, {pipeline_mode = #tpu.pipeline_mode<synchronous>, transform_indices = @transform_5, window_bounds = array<i64: 16, 128>}, {pipeline_mode = #tpu.pipeline_mode<synchronous>, transform_indices = @transform_6, window_bounds = array<i64: 1, 128>}, {transform_indices = @transform_7, window_bounds = array<i64: 128, 128>}]} {
    %c0 = arith.constant 0 : index
    %c0_0 = arith.constant 0 : index
    %0 = vector.load %arg1[%c0, %c0_0] : memref<128x256xf32, #tpu.memory_space<vmem>>, vector<128x256xf32>
    %c0_1 = arith.constant 0 : index
    %c0_2 = arith.constant 0 : index
    %1 = vector.load %arg3[%c0_1, %c0_2] : memref<256x16xf32, #tpu.memory_space<vmem>>, vector<256x16xf32>
    %cst = arith.constant dense<0.000000e+00> : vector<128x16xf32>
    %2 = tpu.matmul %0, %1, %cst {dimension_numbers = #tpu.dot_dimension_numbers<[1], [0], [0], [1], [0, 0, 1, 1], [], []>} : vector<128x256xf32>, vector<256x16xf32>, vector<128x16xf32> -> vector<128x16xf32>
    %c0_3 = arith.constant 0 : index
    %c0_4 = arith.constant 0 : index
    %3 = vector.load %arg2[%c0_3, %c0_4] : memref<128x1xf32, #tpu.memory_space<vmem>>, vector<128x1xf32>
    %4 = vector.broadcast %3 : vector<128x1xf32> to vector<128x16xf32>
    %5 = arith.mulf %2, %4 : vector<128x16xf32>
    %c0_5 = arith.constant 0 : index
    %c0_6 = arith.constant 0 : index
    %6 = vector.load %arg5[%c0_5, %c0_6] : memref<16x128xf32, #tpu.memory_space<vmem>>, vector<16x128xf32>
    %cst_7 = arith.constant dense<0.000000e+00> : vector<128x128xf32>
    %7 = tpu.matmul %5, %6, %cst_7 {dimension_numbers = #tpu.dot_dimension_numbers<[1], [0], [0], [1], [0, 0, 1, 1], [], []>} : vector<128x16xf32>, vector<16x128xf32>, vector<128x128xf32> -> vector<128x128xf32>
    %c0_8 = arith.constant 0 : index
    %c0_9 = arith.constant 0 : index
    %8 = vector.load %arg4[%c0_8, %c0_9] : memref<128x16xf32, #tpu.memory_space<vmem>>, vector<128x16xf32>
    %c0_10 = arith.constant 0 : index
    %c0_11 = arith.constant 0 : index
    %9 = vector.load %arg6[%c0_10, %c0_11] : memref<16x128xf32, #tpu.memory_space<vmem>>, vector<16x128xf32>
    %cst_12 = arith.constant dense<0.000000e+00> : vector<128x128xf32>
    %10 = tpu.matmul %8, %9, %cst_12 {dimension_numbers = #tpu.dot_dimension_numbers<[1], [0], [0], [1], [0, 0, 1, 1], [], []>} : vector<128x16xf32>, vector<16x128xf32>, vector<128x128xf32> -> vector<128x128xf32>
    %11 = arith.addf %7, %10 : vector<128x128xf32>
    %c0_13 = arith.constant 0 : index
    %c0_14 = arith.constant 0 : index
    %12 = vector.load %arg7[%c0_13, %c0_14] : memref<1x128xf32, #tpu.memory_space<vmem>>, vector<1x128xf32>
    %13 = vector.broadcast %12 : vector<1x128xf32> to vector<128x128xf32>
    %14 = arith.addf %11, %13 : vector<128x128xf32>
    %cst_15 = arith.constant 0.000000e+00 : f32
    %15 = vector.broadcast %cst_15 : f32 to vector<128x128xf32>
    %16 = arith.maximumf %14, %15 : vector<128x128xf32>
    %c0_16 = arith.constant 0 : index
    %c0_17 = arith.constant 0 : index
    %17 = vector.load %arg8[%c0_16, %c0_17] : memref<128x128xf32, #tpu.memory_space<vmem>>, vector<128x128xf32>
    tpu.vector_store %arg8[%c0_16, %c0_17], %16 {strides = array<i32>} : memref<128x128xf32, #tpu.memory_space<vmem>>, vector<128x128xf32>,
    return
  }
  func.func @transform_0(%arg0: i32) -> (i32, i32) {
    %c0_i32 = arith.constant 0 : i32
    %c0_i32_0 = arith.constant 0 : i32
    return %arg0, %c0_i32 : i32, i32
  }
  func.func @transform_1(%arg0: i32) -> (i32, i32) {
    %c0_i32 = arith.constant 0 : i32
    %c0_i32_0 = arith.constant 0 : i32
    return %arg0, %c0_i32 : i32, i32
  }
  func.func @transform_2(%arg0: i32) -> (i32, i32) {
    %c0_i32 = arith.constant 0 : i32
    %c0_i32_0 = arith.constant 0 : i32
    %c0_i32_1 = arith.constant 0 : i32
    return %c0_i32, %c0_i32_0 : i32, i32
  }
  func.func @transform_3(%arg0: i32) -> (i32, i32) {
    %c0_i32 = arith.constant 0 : i32
    %c0_i32_0 = arith.constant 0 : i32
    return %arg0, %c0_i32 : i32, i32
  }
  func.func @transform_4(%arg0: i32) -> (i32, i32) {
    %c0_i32 = arith.constant 0 : i32
    %c0_i32_0 = arith.constant 0 : i32
    %c0_i32_1 = arith.constant 0 : i32
    return %c0_i32, %c0_i32_0 : i32, i32
  }
  func.func @transform_5(%arg0: i32) -> (i32, i32) {
    %c0_i32 = arith.constant 0 : i32
    %c0_i32_0 = arith.constant 0 : i32
    %c0_i32_1 = arith.constant 0 : i32
    return %c0_i32, %c0_i32_0 : i32, i32
  }
  func.func @transform_6(%arg0: i32) -> (i32, i32) {
    %c0_i32 = arith.constant 0 : i32
    %c0_i32_0 = arith.constant 0 : i32
    %c0_i32_1 = arith.constant 0 : i32
    return %c0_i32, %c0_i32_0 : i32, i32
  }
  func.func @transform_7(%arg0: i32) -> (i32, i32) {
    %c0_i32 = arith.constant 0 : i32
    %c0_i32_0 = arith.constant 0 : i32
    return %arg0, %c0_i32 : i32, i32
  }
}

</mosaic_0001>

<llo_original>
// kernel: tpu_custom_call.1
$region0: #{tpu_custom_call.1}
  #allocation0 [shape = 'u32[]', space=smem, size = 0x4, offset = 0x4, fixed_abs, tag = 'smem constant byte address 0x4 - core index']
  #allocation1 [shape = 'u32[72,128]{1,0:T(1,128)}', space=vmem, size = 0x9000, scoped, tag = 'internal scratch']
  %s0 = inlined_call_operand.vmem [shape: f32[256,256], index: 0, kind: input, shape index: {}]
  %s1 = inlined_call_operand.vmem [shape: f32[256,1], index: 1, kind: input, shape index: {}]
  %s2 = inlined_call_operand.vmem [shape: f32[256,16], index: 2, kind: input, shape index: {}]
  %s3 = inlined_call_operand.vmem [shape: f32[256,16], index: 3, kind: input, shape index: {}]
  %s4 = inlined_call_operand.vmem [shape: f32[16,128], index: 4, kind: input, shape index: {}]
  %s5 = inlined_call_operand.vmem [shape: f32[16,128], index: 5, kind: input, shape index: {}]
  %s6 = inlined_call_operand.vmem [shape: f32[1,128], index: 6, kind: input, shape index: {}]
  %s7 = inlined_call_operand.hbm [shape: f32[256,128], index: 7, kind: output, shape index: {}]
  %s8 = sld [smem:[#allocation0]]
  $region61: #{tpu_custom_call.1} parent=0
    _
  %s10 = ssub.s32 1, %s8
  %s11 = scalar_select 0, %s10, %s8
  $region1: #{tpu_custom_call.1} parent=0
    #allocation2 [shape = 'u8[131072]{0}', space=vmem, size = 0x20000, scoped, tag = 'output window, operand 0']
    #allocation3 [shape = 's32[2]{0}', space=sflag, size = 0x8, scoped, tag = 'scoped memory for tpu_custom_call.1']
    %12 = vsyncpa [#allocation3], 0
    %s13 = scalar_lea.sflag [#allocation3], 1
    %14 = vsyncpa %s13, 0
    loop: start=0, step=1, limit=4
    $region2: #{tpu_custom_call.1} parent=1 // loop_pre_header
      _
    $region3: #{tpu_custom_call.1} parent=1 // loop_header
      %s16 = sphi 0, %s20
      %p17 = scmp.ge.s32.totalorder %s16, 4
      %s26 = sphi 0, %s28
      %s29 = sphi 0, %s26
      %s30 = sphi 0, %s29
      %s46 = sphi 0, %s30
      %s52 = sphi 0, %s54
      %s55 = sphi 0, %s52
      %s56 = sphi 0, %s55
      %s72 = sphi 0, %s56
      %s76 = sphi 0, %s76
      %s78 = sphi 0, %s76
      %s79 = sphi 0, %s78
      %s93 = sphi 0, %s79
      %s99 = sphi 0, %s101
      %s102 = sphi 0, %s99
      %s103 = sphi 0, %s102
      %s119 = sphi 0, %s103
      %s123 = sphi 0, %s123
      %s125 = sphi 0, %s123
      %s126 = sphi 0, %s125
      %s140 = sphi 0, %s126
      %s144 = sphi 0, %s144
      %s146 = sphi 0, %s144
      %s147 = sphi 0, %s146
      %s161 = sphi 0, %s147
      %s165 = sphi 0, %s165
      %s167 = sphi 0, %s165
      %s168 = sphi 0, %s167
      %s182 = sphi 0, %s168
      %s188 = sphi 0, %s190
      %s191 = sphi 0, %s188
      %s192 = sphi 0, %s191
      %s208 = sphi 0, %s192
    $region4: #{tpu_custom_call.1} parent=1 // loop_header_branch
      %19 = sbr.rel (%p17) target = $region8
    $region5: #{tpu_custom_call.1} parent=1 // loop_body
      %s21 = ssub.s32 %s16, 1
      %s22 = ssub.s32 %s16, 2
      %s23 = sadd.s32 %s16, 1
      %s24 = ssub.s32 %s16, %s23
      %p25 = scmp.eq.s32.totalorder %s24, 0
      %s27 = sadd.s32 %s26, 1
      %s28 = scalar_select %p25, %s26, %s27
      %p31 = pneg %p25
      %p32 = scmp.eq.s32.totalorder %s16, 1
      %p33 = por %p31, %p32
      %p34 = scmp.ne.s32.totalorder %s26, %s29
      %p35 = scmp.eq.s32.totalorder %s16, 0
      %p36 = por %p34, %p35
      %p37 = scmp.ne.s32.totalorder %s26, %s29
      %p38 = scmp.eq.s32.totalorder %s21, 1
      %p39 = por %p37, %p38
      %p40 = scmp.ne.s32.totalorder %s29, %s30
      %p41 = scmp.eq.s32.totalorder %s21, 0
      %p42 = por %p40, %p41
      %p43 = scmp.ne.s32.totalorder %s29, %s30
      %p44 = scmp.eq.s32.totalorder %s22, 1
      %p45 = por %p43, %p44
      %p47 = scmp.ne.s32.totalorder %s30, %s46
      %p48 = scmp.eq.s32.totalorder %s22, 0
      %p49 = por %p47, %p48
      %s50 = ssub.s32 %s16, %s23
      %p51 = scmp.eq.s32.totalorder %s50, 0
      %s53 = sadd.s32 %s52, 1
      %s54 = scalar_select %p51, %s52, %s53
      %p57 = pneg %p51
      %p58 = scmp.eq.s32.totalorder %s16, 1
      %p59 = por %p57, %p58
      %p60 = scmp.ne.s32.totalorder %s52, %s55
      %p61 = scmp.eq.s32.totalorder %s16, 0
      %p62 = por %p60, %p61
      %p63 = scmp.ne.s32.totalorder %s52, %s55
      %p64 = scmp.eq.s32.totalorder %s21, 1
      %p65 = por %p63, %p64
      %p66 = scmp.ne.s32.totalorder %s55, %s56
      %p67 = scmp.eq.s32.totalorder %s21, 0
      %p68 = por %p66, %p67
      %p69 = scmp.ne.s32.totalorder %s55, %s56
      %p70 = scmp.eq.s32.totalorder %s22, 1
      %p71 = por %p69, %p70
      %p73 = scmp.ne.s32.totalorder %s56, %s72
      %p74 = scmp.eq.s32.totalorder %s22, 0
      %p75 = por %p73, %p74
      %s77 = sadd.s32 %s76, 1
      %p80 = scmp.eq.s32.totalorder %s16, 1
      %p81 = scmp.ne.s32.totalorder %s76, %s78
      %p82 = scmp.eq.s32.totalorder %s16, 0
      %p83 = por %p81, %p82
      %p84 = scmp.ne.s32.totalorder %s76, %s78
      %p85 = scmp.eq.s32.totalorder %s21, 1
      %p86 = por %p84, %p85
      %p87 = scmp.ne.s32.totalorder %s78, %s79
      %p88 = scmp.eq.s32.totalorder %s21, 0
      %p89 = por %p87, %p88
      %p90 = scmp.ne.s32.totalorder %s78, %s79
      %p91 = scmp.eq.s32.totalorder %s22, 1
      %p92 = por %p90, %p91
      %p94 = scmp.ne.s32.totalorder %s79, %s93
      %p95 = scmp.eq.s32.totalorder %s22, 0
      %p96 = por %p94, %p95
      %s97 = ssub.s32 %s16, %s23
      %p98 = scmp.eq.s32.totalorder %s97, 0
      %s100 = sadd.s32 %s99, 1
      %s101 = scalar_select %p98, %s99, %s100
      %p104 = pneg %p98
      %p105 = scmp.eq.s32.totalorder %s16, 1
      %p106 = por %p104, %p105
      %p107 = scmp.ne.s32.totalorder %s99, %s102
      %p108 = scmp.eq.s32.totalorder %s16, 0
      %p109 = por %p107, %p108
      %p110 = scmp.ne.s32.totalorder %s99, %s102
      %p111 = scmp.eq.s32.totalorder %s21, 1
      %p112 = por %p110, %p111
      %p113 = scmp.ne.s32.totalorder %s102, %s103
      %p114 = scmp.eq.s32.totalorder %s21, 0
      %p115 = por %p113, %p114
      %p116 = scmp.ne.s32.totalorder %s102, %s103
      %p117 = scmp.eq.s32.totalorder %s22, 1
      %p118 = por %p116, %p117
      %p120 = scmp.ne.s32.totalorder %s103, %s119
      %p121 = scmp.eq.s32.totalorder %s22, 0
      %p122 = por %p120, %p121
      %s124 = sadd.s32 %s123, 1
      %p127 = scmp.eq.s32.totalorder %s16, 1
      %p128 = scmp.ne.s32.totalorder %s123, %s125
      %p129 = scmp.eq.s32.totalorder %s16, 0
      %p130 = por %p128, %p129
      %p131 = scmp.ne.s32.totalorder %s123, %s125
      %p132 = scmp.eq.s32.totalorder %s21, 1
      %p133 = por %p131, %p132
      %p134 = scmp.ne.s32.totalorder %s125, %s126
      %p135 = scmp.eq.s32.totalorder %s21, 0
      %p136 = por %p134, %p135
      %p137 = scmp.ne.s32.totalorder %s125, %s126
      %p138 = scmp.eq.s32.totalorder %s22, 1
      %p139 = por %p137, %p138
      %p141 = scmp.ne.s32.totalorder %s126, %s140
      %p142 = scmp.eq.s32.totalorder %s22, 0
      %p143 = por %p141, %p142
      %s145 = sadd.s32 %s144, 1
      %p148 = scmp.eq.s32.totalorder %s16, 1
      %p149 = scmp.ne.s32.totalorder %s144, %s146
      %p150 = scmp.eq.s32.totalorder %s16, 0
      %p151 = por %p149, %p150
      %p152 = scmp.ne.s32.totalorder %s144, %s146
      %p153 = scmp.eq.s32.totalorder %s21, 1
      %p154 = por %p152, %p153
      %p155 = scmp.ne.s32.totalorder %s146, %s147
      %p156 = scmp.eq.s32.totalorder %s21, 0
      %p157 = por %p155, %p156
      %p158 = scmp.ne.s32.totalorder %s146, %s147
      %p159 = scmp.eq.s32.totalorder %s22, 1
      %p160 = por %p158, %p159
      %p162 = scmp.ne.s32.totalorder %s147, %s161
      %p163 = scmp.eq.s32.totalorder %s22, 0
      %p164 = por %p162, %p163
      %s166 = sadd.s32 %s165, 1
      %p169 = scmp.eq.s32.totalorder %s16, 1
      %p170 = scmp.ne.s32.totalorder %s165, %s167
      %p171 = scmp.eq.s32.totalorder %s16, 0
      %p172 = por %p170, %p171
      %p173 = scmp.ne.s32.totalorder %s165, %s167
      %p174 = scmp.eq.s32.totalorder %s21, 1
      %p175 = por %p173, %p174
      %p176 = scmp.ne.s32.totalorder %s167, %s168
      %p177 = scmp.eq.s32.totalorder %s21, 0
      %p178 = por %p176, %p177
      %p179 = scmp.ne.s32.totalorder %s167, %s168
      %p180 = scmp.eq.s32.totalorder %s22, 1
      %p181 = por %p179, %p180
      %p183 = scmp.ne.s32.totalorder %s168, %s182
      %p184 = scmp.eq.s32.totalorder %s22, 0
      %p185 = por %p183, %p184
      %s186 = ssub.s32 %s16, %s23
      %p187 = scmp.eq.s32.totalorder %s186, 0
      %s189 = sadd.s32 %s188, 1
      %s190 = scalar_select %p187, %s188, %s189
      %p193 = pneg %p187
      %p194 = scmp.eq.s32.totalorder %s16, 1
      %p195 = por %p193, %p194
      %p196 = scmp.ne.s32.totalorder %s188, %s191
      %p197 = scmp.eq.s32.totalorder %s16, 0
      %p198 = por %p196, %p197
      %p199 = scmp.ne.s32.totalorder %s188, %s191
      %p200 = scmp.eq.s32.totalorder %s21, 1
      %p201 = por %p199, %p200
      %p202 = scmp.ne.s32.totalorder %s191, %s192
      %p203 = scmp.eq.s32.totalorder %s21, 0
      %p204 = por %p202, %p203
      %p205 = scmp.ne.s32.totalorder %s191, %s192
      %p206 = scmp.eq.s32.totalorder %s22, 1
      %p207 = por %p205, %p206
      %p209 = scmp.ne.s32.totalorder %s192, %s208
      %p210 = scmp.eq.s32.totalorder %s22, 0
      %p211 = por %p209, %p210
      %p212 = scmp.le.s32.totalorder 1, %s16
      %p213 = scmp.lt.s32.totalorder %s16, 3
      %p214 = pnand %p212, %p213
      %p215 = pneg %p214
      // Predicated region
      $region9: #{tpu_custom_call.1} parent=5 // pred_check
        _
      $region10: #{tpu_custom_call.1} parent=5 // pred_check_branch
        %217 = sbr.rel (%p214) target = $region12
      $region11: #{tpu_custom_call.1} parent=5 // pred_region
        %s218 = ssub.s32 %s16, 1
        // Predicated region
        $region13: #{tpu_custom_call.1} parent=11 // pred_check
          %p219 = pneg %p89
        $region14: #{tpu_custom_call.1} parent=11 // pred_check_branch
          %221 = sbr.rel (%p219) target = $region16
        $region15: #{tpu_custom_call.1} parent=11 // pred_region
          _
        $region16: #{tpu_custom_call.1} parent=11 // pred_fallthru
          _
        // Predicated region
        $region17: #{tpu_custom_call.1} parent=11 // pred_check
          %p222 = pneg %p136
        $region18: #{tpu_custom_call.1} parent=11 // pred_check_branch
          %224 = sbr.rel (%p222) target = $region20
        $region19: #{tpu_custom_call.1} parent=11 // pred_region
          _
        $region20: #{tpu_custom_call.1} parent=11 // pred_fallthru
          _
        // Predicated region
        $region21: #{tpu_custom_call.1} parent=11 // pred_check
          %p225 = pneg %p157
        $region22: #{tpu_custom_call.1} parent=11 // pred_check_branch
          %227 = sbr.rel (%p225) target = $region24
        $region23: #{tpu_custom_call.1} parent=11 // pred_region
          _
        $region24: #{tpu_custom_call.1} parent=11 // pred_fallthru
          _
        // Predicated region
        $region25: #{tpu_custom_call.1} parent=11 // pred_check
          %p228 = pneg %p178
        $region26: #{tpu_custom_call.1} parent=11 // pred_check_branch
          %230 = sbr.rel (%p228) target = $region28
        $region27: #{tpu_custom_call.1} parent=11 // pred_region
          _
        $region28: #{tpu_custom_call.1} parent=11 // pred_fallthru
          _
      $region12: #{tpu_custom_call.1} parent=5 // pred_fallthru
        _
      %p231 = scmp.lt.s32.totalorder %s16, 2
      // Predicated region
      $region29: #{tpu_custom_call.1} parent=5 // pred_check
        %p232 = pneg %p231
      $region30: #{tpu_custom_call.1} parent=5 // pred_check_branch
        %234 = sbr.rel (%p232) target = $region32
      $region31: #{tpu_custom_call.1} parent=5 // pred_region
        // Predicated region
        $region33: #{tpu_custom_call.1} parent=31 // pred_check
          %p235 = pneg %p36
        $region34: #{tpu_custom_call.1} parent=31 // pred_check_branch
          %237 = sbr.rel (%p235) target = $region36
        $region35: #{tpu_custom_call.1} parent=31 // pred_region
          %s238 = smul.u32 16, %s16
          %p239 = scmp.lt.s32.totalorder %s238, 31
          %s240 = scalar_select %p239, %s238, 31
          %s241 = smul.addr %s240, 2
          %s242 = smul.addr %s241, 8
          %s243 = scalar_lea.vmem %s0, %s242
          %s244 = smul.u32 16, %s16
        $region36: #{tpu_custom_call.1} parent=31 // pred_fallthru
          _
        // Predicated region
        $region37: #{tpu_custom_call.1} parent=31 // pred_check
          %p245 = pneg %p62
        $region38: #{tpu_custom_call.1} parent=31 // pred_check_branch
          %247 = sbr.rel (%p245) target = $region40
        $region39: #{tpu_custom_call.1} parent=31 // pred_region
          %s248 = smul.u32 16, %s16
          %p249 = scmp.lt.s32.totalorder %s248, 31
          %s250 = scalar_select %p249, %s248, 31
          %s251 = smul.addr %s250, 8
          %s252 = scalar_lea.vmem %s1, %s251
          %s253 = smul.u32 16, %s16
        $region40: #{tpu_custom_call.1} parent=31 // pred_fallthru
          _
        // Predicated region
        $region41: #{tpu_custom_call.1} parent=31 // pred_check
          %p254 = pneg %p109
        $region42: #{tpu_custom_call.1} parent=31 // pred_check_branch
          %256 = sbr.rel (%p254) target = $region44
        $region43: #{tpu_custom_call.1} parent=31 // pred_region
          %s257 = smul.u32 16, %s16
          %p258 = scmp.lt.s32.totalorder %s257, 31
          %s259 = scalar_select %p258, %s257, 31
          %s260 = smul.addr %s259, 8
          %s261 = scalar_lea.vmem %s3, %s260
          %s262 = smul.u32 16, %s16
        $region44: #{tpu_custom_call.1} parent=31 // pred_fallthru
          _
      $region32: #{tpu_custom_call.1} parent=5 // pred_fallthru
        _
      %p263 = scmp.le.s32.totalorder 1, %s16
      %p264 = scmp.lt.s32.totalorder %s16, 3
      %p265 = pnand %p263, %p264
      %p266 = pneg %p265
      // Predicated region
      $region45: #{tpu_custom_call.1} parent=5 // pred_check
        _
      $region46: #{tpu_custom_call.1} parent=5 // pred_check_branch
        %268 = sbr.rel (%p265) target = $region48
      $region47: #{tpu_custom_call.1} parent=5 // pred_region
        %s269 = ssub.s32 %s16, 1
        %s270 = smul.u32 16, %s21
        %p271 = scmp.lt.s32.totalorder %s270, 31
        %s272 = scalar_select %p271, %s270, 31
        %s273 = smul.addr %s272, 2
        %s274 = smul.addr %s273, 8
        %s275 = scalar_lea.vmem %s0, %s274
        %p276 = pneg %p42
        %p277 = pneg %p39
        %s278 = smul.u32 16, %s21
        %p279 = scmp.lt.s32.totalorder %s278, 31
        %s280 = scalar_select %p279, %s278, 31
        %s281 = smul.addr %s280, 8
        %s282 = scalar_lea.vmem %s1, %s281
        %p283 = pneg %p68
        %p284 = pneg %p65
        %p285 = pneg %p89
        %p286 = pneg %p86
        %s287 = smul.u32 16, %s21
        %p288 = scmp.lt.s32.totalorder %s287, 31
        %s289 = scalar_select %p288, %s287, 31
        %s290 = smul.addr %s289, 8
        %s291 = scalar_lea.vmem %s3, %s290
        %p292 = pneg %p115
        %p293 = pneg %p112
        %p294 = pneg %p136
        %p295 = pneg %p133
        %p296 = pneg %p157
        %p297 = pneg %p154
        %p298 = pneg %p178
        %p299 = pneg %p175
        %p300 = pneg %p204
        %p301 = pneg %p201
        %s302 = sand.u32 %s191, 1
        %s303 = scalar_lea.sflag [#allocation3], %s302
        %s304 = sand.u32 %s191, 1
        %s305 = smul.addr %s304, 128
        %s306 = scalar_lea.vmem [#allocation2], %s305
        %s307 = smul.u32 16, %s21
        %p308 = scmp.lt.s32.totalorder %s307, 31
        %s309 = scalar_select %p308, %s307, 31
        %s310 = smul.addr %s309, 2
        %s311 = smul.addr %s310, 8
        %s312 = scalar_lea.vmem %s0, %s311
        %s313 = smul.u32 16, %s21
        %s314 = smul.u32 16, %s21
        %p315 = scmp.lt.s32.totalorder %s314, 31
        %s316 = scalar_select %p315, %s314, 31
        %s317 = smul.addr %s316, 8
        %s318 = scalar_lea.vmem %s1, %s317
        %s319 = smul.u32 16, %s21
        %s320 = smul.u32 16, %s21
        %p321 = scmp.lt.s32.totalorder %s320, 31
        %s322 = scalar_select %p321, %s320, 31
        %s323 = smul.addr %s322, 8
        %s324 = scalar_lea.vmem %s3, %s323
        %s325 = smul.u32 16, %s21
        %s326 = smul.u32 16, %s21
        %v327 = vld [vmem:[%s312] sm:$0xff]
        %v328 = vld [vmem:[%s312 + $0x8] sm:$0xff]
        %v329 = vld [vmem:[%s312 + $0x10] sm:$0xff]
        %v330 = vld [vmem:[%s312 + $0x18] sm:$0xff]
        %v331 = vld [vmem:[%s312 + $0x20] sm:$0xff]
        %v332 = vld [vmem:[%s312 + $0x28] sm:$0xff]
        %v333 = vld [vmem:[%s312 + $0x30] sm:$0xff]
        %v334 = vld [vmem:[%s312 + $0x38] sm:$0xff]
        %v335 = vld [vmem:[%s312 + $0x40] sm:$0xff]
        %v336 = vld [vmem:[%s312 + $0x48] sm:$0xff]
        %v337 = vld [vmem:[%s312 + $0x50] sm:$0xff]
        %v338 = vld [vmem:[%s312 + $0x58] sm:$0xff]
        %v339 = vld [vmem:[%s312 + $0x60] sm:$0xff]
        %v340 = vld [vmem:[%s312 + $0x68] sm:$0xff]
        %v341 = vld [vmem:[%s312 + $0x70] sm:$0xff]
        %v342 = vld [vmem:[%s312 + $0x78] sm:$0xff]
        %v343 = vld [vmem:[%s312 + $0x80] sm:$0xff]
        %v344 = vld [vmem:[%s312 + $0x88] sm:$0xff]
        %v345 = vld [vmem:[%s312 + $0x90] sm:$0xff]
        %v346 = vld [vmem:[%s312 + $0x98] sm:$0xff]
        %v347 = vld [vmem:[%s312 + $0xa0] sm:$0xff]
        %v348 = vld [vmem:[%s312 + $0xa8] sm:$0xff]
        %v349 = vld [vmem:[%s312 + $0xb0] sm:$0xff]
        %v350 = vld [vmem:[%s312 + $0xb8] sm:$0xff]
        %v351 = vld [vmem:[%s312 + $0xc0] sm:$0xff]
        %v352 = vld [vmem:[%s312 + $0xc8] sm:$0xff]
        %v353 = vld [vmem:[%s312 + $0xd0] sm:$0xff]
        %v354 = vld [vmem:[%s312 + $0xd8] sm:$0xff]
        %v355 = vld [vmem:[%s312 + $0xe0] sm:$0xff]
        %v356 = vld [vmem:[%s312 + $0xe8] sm:$0xff]
        %v357 = vld [vmem:[%s312 + $0xf0] sm:$0xff]
        %v358 = vld [vmem:[%s312 + $0xf8] sm:$0xff]
        %v359 = vld [vmem:[%s2] sm:$0xff]
        %v360 = vld [vmem:[%s2 + $0x8] sm:$0xff]
        %v361 = vld [vmem:[%s2 + $0x10] sm:$0xff]
        %v362 = vld [vmem:[%s2 + $0x18] sm:$0xff]
        %v363 = vld [vmem:[%s2 + $0x20] sm:$0xff]
        %v364 = vld [vmem:[%s2 + $0x28] sm:$0xff]
        %v365 = vld [vmem:[%s2 + $0x30] sm:$0xff]
        %v366 = vld [vmem:[%s2 + $0x38] sm:$0xff]
        %v367 = vld [vmem:[%s2 + $0x40] sm:$0xff]
        %v368 = vld [vmem:[%s2 + $0x48] sm:$0xff]
        %v369 = vld [vmem:[%s2 + $0x50] sm:$0xff]
        %v370 = vld [vmem:[%s2 + $0x58] sm:$0xff]
        %v371 = vld [vmem:[%s2 + $0x60] sm:$0xff]
        %v372 = vld [vmem:[%s2 + $0x68] sm:$0xff]
        %v373 = vld [vmem:[%s2 + $0x70] sm:$0xff]
        %v374 = vld [vmem:[%s2 + $0x78] sm:$0xff]
        %v375 = vld [vmem:[%s2 + $0x80] sm:$0xff]
        %v376 = vld [vmem:[%s2 + $0x88] sm:$0xff]
        %v377 = vld [vmem:[%s2 + $0x90] sm:$0xff]
        %v378 = vld [vmem:[%s2 + $0x98] sm:$0xff]
        %v379 = vld [vmem:[%s2 + $0xa0] sm:$0xff]
        %v380 = vld [vmem:[%s2 + $0xa8] sm:$0xff]
        %v381 = vld [vmem:[%s2 + $0xb0] sm:$0xff]
        %v382 = vld [vmem:[%s2 + $0xb8] sm:$0xff]
        %v383 = vld [vmem:[%s2 + $0xc0] sm:$0xff]
        %v384 = vld [vmem:[%s2 + $0xc8] sm:$0xff]
        %v385 = vld [vmem:[%s2 + $0xd0] sm:$0xff]
        %v386 = vld [vmem:[%s2 + $0xd8] sm:$0xff]
        %v387 = vld [vmem:[%s2 + $0xe0] sm:$0xff]
        %v388 = vld [vmem:[%s2 + $0xe8] sm:$0xff]
        %v389 = vld [vmem:[%s2 + $0xf0] sm:$0xff]
        %v390 = vld [vmem:[%s2 + $0xf8] sm:$0xff]
        %391 = vmatpush.msra.mxu0 %v374
        %392 = vmatpush.msra.mxu0 %v373
        %393 = vmatpush.msra.mxu0 %v372
        %394 = vmatpush.msra.mxu0 %v371
        %395 = vmatpush.msra.mxu0 %v370
        %396 = vmatpush.msra.mxu0 %v369
        %397 = vmatpush.msra.mxu0 %v368
        %398 = vmatpush.msra.mxu0 %v367
        %399 = vmatpush.msra.mxu0 %v366
        %400 = vmatpush.msra.mxu0 %v365
        %401 = vmatpush.msra.mxu0 %v364
        %402 = vmatpush.msra.mxu0 %v363
        %403 = vmatpush.msra.mxu0 %v362
        %404 = vmatpush.msra.mxu0 %v361
        %405 = vmatpush.msra.mxu0 %v360
        %406 = vmatpush.msra.mxu0 %v359
        %407 = vmatmul.f32.gmra.mxu0 %v327
        %v408 = vpop.f32.mrf.mxu0
        %v409 = vadd.f32 0.0, %v408
        %410 = vmatmul.f32.gmra.mxu0 %v329
        %v411 = vpop.f32.mrf.mxu0
        %v412 = vadd.f32 0.0, %v411
        %413 = vmatmul.f32.gmra.mxu0 %v331
        %v414 = vpop.f32.mrf.mxu0
        %v415 = vadd.f32 0.0, %v414
        %416 = vmatmul.f32.gmra.mxu0 %v333
        %v417 = vpop.f32.mrf.mxu0
        %v418 = vadd.f32 0.0, %v417
        %419 = vmatmul.f32.gmra.mxu0 %v335
        %v420 = vpop.f32.mrf.mxu0
        %v421 = vadd.f32 0.0, %v420
        %422 = vmatmul.f32.gmra.mxu0 %v337
        %v423 = vpop.f32.mrf.mxu0
        %v424 = vadd.f32 0.0, %v423
        %425 = vmatmul.f32.gmra.mxu0 %v339
        %v426 = vpop.f32.mrf.mxu0
        %v427 = vadd.f32 0.0, %v426
        %428 = vmatmul.f32.gmra.mxu0 %v341
        %v429 = vpop.f32.mrf.mxu0
        %v430 = vadd.f32 0.0, %v429
        %431 = vmatmul.f32.gmra.mxu0 %v343
        %v432 = vpop.f32.mrf.mxu0
        %v433 = vadd.f32 0.0, %v432
        %434 = vmatmul.f32.gmra.mxu0 %v345
        %v435 = vpop.f32.mrf.mxu0
        %v436 = vadd.f32 0.0, %v435
        %437 = vmatmul.f32.gmra.mxu0 %v347
        %v438 = vpop.f32.mrf.mxu0
        %v439 = vadd.f32 0.0, %v438
        %440 = vmatmul.f32.gmra.mxu0 %v349
        %v441 = vpop.f32.mrf.mxu0
        %v442 = vadd.f32 0.0, %v441
        %443 = vmatmul.f32.gmra.mxu0 %v351
        %v444 = vpop.f32.mrf.mxu0
        %v445 = vadd.f32 0.0, %v444
        %446 = vmatmul.f32.gmra.mxu0 %v353
        %v447 = vpop.f32.mrf.mxu0
        %v448 = vadd.f32 0.0, %v447
        %449 = vmatmul.f32.gmra.mxu0 %v355
        %v450 = vpop.f32.mrf.mxu0
        %v451 = vadd.f32 0.0, %v450
        %452 = vmatmul.f32.gmra.mxu0 %v357
        %v453 = vpop.f32.mrf.mxu0
        %v454 = vadd.f32 0.0, %v453
        %455 = vdwg.mxu0
        %456 = vmatpush.msra.mxu0 %v390
        %457 = vmatpush.msra.mxu0 %v389
        %458 = vmatpush.msra.mxu0 %v388
        %459 = vmatpush.msra.mxu0 %v387
        %460 = vmatpush.msra.mxu0 %v386
        %461 = vmatpush.msra.mxu0 %v385
        %462 = vmatpush.msra.mxu0 %v384
        %463 = vmatpush.msra.mxu0 %v383
        %464 = vmatpush.msra.mxu0 %v382
        %465 = vmatpush.msra.mxu0 %v381
        %466 = vmatpush.msra.mxu0 %v380
        %467 = vmatpush.msra.mxu0 %v379
        %468 = vmatpush.msra.mxu0 %v378
        %469 = vmatpush.msra.mxu0 %v377
        %470 = vmatpush.msra.mxu0 %v376
        %471 = vmatpush.msra.mxu0 %v375
        %472 = vmatmul.f32.gmra.mxu0 %v328
        %v473 = vpop.f32.mrf.mxu0
        %v474 = vadd.f32 %v409, %v473
        %475 = vmatmul.f32.gmra.mxu0 %v330
        %v476 = vpop.f32.mrf.mxu0
        %v477 = vadd.f32 %v412, %v476
        %478 = vmatmul.f32.gmra.mxu0 %v332
        %v479 = vpop.f32.mrf.mxu0
        %v480 = vadd.f32 %v415, %v479
        %481 = vmatmul.f32.gmra.mxu0 %v334
        %v482 = vpop.f32.mrf.mxu0
        %v483 = vadd.f32 %v418, %v482
        %484 = vmatmul.f32.gmra.mxu0 %v336
        %v485 = vpop.f32.mrf.mxu0
        %v486 = vadd.f32 %v421, %v485
        %487 = vmatmul.f32.gmra.mxu0 %v338
        %v488 = vpop.f32.mrf.mxu0
        %v489 = vadd.f32 %v424, %v488
        %490 = vmatmul.f32.gmra.mxu0 %v340
        %v491 = vpop.f32.mrf.mxu0
        %v492 = vadd.f32 %v427, %v491
        %493 = vmatmul.f32.gmra.mxu0 %v342
        %v494 = vpop.f32.mrf.mxu0
        %v495 = vadd.f32 %v430, %v494
        %496 = vmatmul.f32.gmra.mxu0 %v344
        %v497 = vpop.f32.mrf.mxu0
        %v498 = vadd.f32 %v433, %v497
        %499 = vmatmul.f32.gmra.mxu0 %v346
        %v500 = vpop.f32.mrf.mxu0
        %v501 = vadd.f32 %v436, %v500
        %502 = vmatmul.f32.gmra.mxu0 %v348
        %v503 = vpop.f32.mrf.mxu0
        %v504 = vadd.f32 %v439, %v503
        %505 = vmatmul.f32.gmra.mxu0 %v350
        %v506 = vpop.f32.mrf.mxu0
        %v507 = vadd.f32 %v442, %v506
        %508 = vmatmul.f32.gmra.mxu0 %v352
        %v509 = vpop.f32.mrf.mxu0
        %v510 = vadd.f32 %v445, %v509
        %511 = vmatmul.f32.gmra.mxu0 %v354
        %v512 = vpop.f32.mrf.mxu0
        %v513 = vadd.f32 %v448, %v512
        %514 = vmatmul.f32.gmra.mxu0 %v356
        %v515 = vpop.f32.mrf.mxu0
        %v516 = vadd.f32 %v451, %v515
        %517 = vmatmul.f32.gmra.mxu0 %v358
        %v518 = vpop.f32.mrf.mxu0
        %v519 = vadd.f32 %v454, %v518
        %520 = vdwg.mxu0
        %v521 = vld [vmem:[%s318] sm:$0xff]
        %v522 = vld [vmem:[%s318 + $0x8] sm:$0xff]
        %v523 = vld [vmem:[%s318 + $0x10] sm:$0xff]
        %v524 = vld [vmem:[%s318 + $0x18] sm:$0xff]
        %v525 = vld [vmem:[%s318 + $0x20] sm:$0xff]
        %v526 = vld [vmem:[%s318 + $0x28] sm:$0xff]
        %v527 = vld [vmem:[%s318 + $0x30] sm:$0xff]
        %v528 = vld [vmem:[%s318 + $0x38] sm:$0xff]
        %v529 = vld [vmem:[%s318 + $0x40] sm:$0xff]
        %v530 = vld [vmem:[%s318 + $0x48] sm:$0xff]
        %v531 = vld [vmem:[%s318 + $0x50] sm:$0xff]
        %v532 = vld [vmem:[%s318 + $0x58] sm:$0xff]
        %v533 = vld [vmem:[%s318 + $0x60] sm:$0xff]
        %v534 = vld [vmem:[%s318 + $0x68] sm:$0xff]
        %v535 = vld [vmem:[%s318 + $0x70] sm:$0xff]
        %v536 = vld [vmem:[%s318 + $0x78] sm:$0xff]
        %538 = vset.pattern.permute.xlu0 0
        %539 = vperm.xlu0 %538, %v521
        %v540 = vpop.permute.xlu0 %539
        %543 = vset.pattern.permute.xlu0 0
        %544 = vperm.xlu0 %543, %v522
        %v545 = vpop.permute.xlu0 %544
        %548 = vset.pattern.permute.xlu0 0
        %549 = vperm.xlu0 %548, %v523
        %v550 = vpop.permute.xlu0 %549
        %553 = vset.pattern.permute.xlu0 0
        %554 = vperm.xlu0 %553, %v524
        %v555 = vpop.permute.xlu0 %554
        %558 = vset.pattern.permute.xlu0 0
        %559 = vperm.xlu0 %558, %v525
        %v560 = vpop.permute.xlu0 %559
        %563 = vset.pattern.permute.xlu0 0
        %564 = vperm.xlu0 %563, %v526
        %v565 = vpop.permute.xlu0 %564
        %568 = vset.pattern.permute.xlu0 0
        %569 = vperm.xlu0 %568, %v527
        %v570 = vpop.permute.xlu0 %569
        %573 = vset.pattern.permute.xlu0 0
        %574 = vperm.xlu0 %573, %v528
        %v575 = vpop.permute.xlu0 %574
        %578 = vset.pattern.permute.xlu0 0
        %579 = vperm.xlu0 %578, %v529
        %v580 = vpop.permute.xlu0 %579
        %583 = vset.pattern.permute.xlu0 0
        %584 = vperm.xlu0 %583, %v530
        %v585 = vpop.permute.xlu0 %584
        %588 = vset.pattern.permute.xlu0 0
        %589 = vperm.xlu0 %588, %v531
        %v590 = vpop.permute.xlu0 %589
        %593 = vset.pattern.permute.xlu0 0
        %594 = vperm.xlu0 %593, %v532
        %v595 = vpop.permute.xlu0 %594
        %598 = vset.pattern.permute.xlu0 0
        %599 = vperm.xlu0 %598, %v533
        %v600 = vpop.permute.xlu0 %599
        %603 = vset.pattern.permute.xlu0 0
        %604 = vperm.xlu0 %603, %v534
        %v605 = vpop.permute.xlu0 %604
        %608 = vset.pattern.permute.xlu0 0
        %609 = vperm.xlu0 %608, %v535
        %v610 = vpop.permute.xlu0 %609
        %613 = vset.pattern.permute.xlu0 0
        %614 = vperm.xlu0 %613, %v536
        %v615 = vpop.permute.xlu0 %614
        %v617 = vmul.f32 %v474, %v540
        %v618 = vmul.f32 %v477, %v545
        %v619 = vmul.f32 %v480, %v550
        %v620 = vmul.f32 %v483, %v555
        %v621 = vmul.f32 %v486, %v560
        %v622 = vmul.f32 %v489, %v565
        %v623 = vmul.f32 %v492, %v570
        %v624 = vmul.f32 %v495, %v575
        %v625 = vmul.f32 %v498, %v580
        %v626 = vmul.f32 %v501, %v585
        %v627 = vmul.f32 %v504, %v590
        %v628 = vmul.f32 %v507, %v595
        %v629 = vmul.f32 %v510, %v600
        %v630 = vmul.f32 %v513, %v605
        %v631 = vmul.f32 %v516, %v610
        %v632 = vmul.f32 %v519, %v615
        %v633 = vld [vmem:[%s4] sm:$0xff]
        %v634 = vld [vmem:[%s4 + $0x8] sm:$0xff]
        %v635 = vld [vmem:[%s324] sm:$0xff]
        %v636 = vld [vmem:[%s324 + $0x8] sm:$0xff]
        %v637 = vld [vmem:[%s324 + $0x10] sm:$0xff]
        %v638 = vld [vmem:[%s324 + $0x18] sm:$0xff]
        %v639 = vld [vmem:[%s324 + $0x20] sm:$0xff]
        %v640 = vld [vmem:[%s324 + $0x28] sm:$0xff]
        %v641 = vld [vmem:[%s324 + $0x30] sm:$0xff]
        %v642 = vld [vmem:[%s324 + $0x38] sm:$0xff]
        %v643 = vld [vmem:[%s324 + $0x40] sm:$0xff]
        %v644 = vld [vmem:[%s324 + $0x48] sm:$0xff]
        %v645 = vld [vmem:[%s324 + $0x50] sm:$0xff]
        %v646 = vld [vmem:[%s324 + $0x58] sm:$0xff]
        %v647 = vld [vmem:[%s324 + $0x60] sm:$0xff]
        %v648 = vld [vmem:[%s324 + $0x68] sm:$0xff]
        %v649 = vld [vmem:[%s324 + $0x70] sm:$0xff]
        %v650 = vld [vmem:[%s324 + $0x78] sm:$0xff]
        %v651 = vld [vmem:[%s5] sm:$0xff]
        %v652 = vld [vmem:[%s5 + $0x8] sm:$0xff]
        %vm653 = vcmask 130048
        %v655 = vsel %vm653, %v635, 0
        %v658 = vsel %vm653, %v636, 0
        %v661 = vsel %vm653, %v637, 0
        %v664 = vsel %vm653, %v638, 0
        %v667 = vsel %vm653, %v639, 0
        %v670 = vsel %vm653, %v640, 0
        %v673 = vsel %vm653, %v641, 0
        %v676 = vsel %vm653, %v642, 0
        %v679 = vsel %vm653, %v643, 0
        %v682 = vsel %vm653, %v644, 0
        %v685 = vsel %vm653, %v645, 0
        %v688 = vsel %vm653, %v646, 0
        %v691 = vsel %vm653, %v647, 0
        %v694 = vsel %vm653, %v648, 0
        %v697 = vsel %vm653, %v649, 0
        %v700 = vsel %vm653, %v650, 0
        %702 = vmatpush.msra.mxu0 0.0
        %703 = vmatpush.msra.mxu0 0.0
        %704 = vmatpush.msra.mxu0 0.0
        %705 = vmatpush.msra.mxu0 0.0
        %706 = vmatpush.msra.mxu0 0.0
        %707 = vmatpush.msra.mxu0 0.0
        %708 = vmatpush.msra.mxu0 0.0
        %709 = vmatpush.msra.mxu0 0.0
        %710 = vmatpush.msra.mxu0 0.0
        %711 = vmatpush.msra.mxu0 0.0
        %712 = vmatpush.msra.mxu0 0.0
        %713 = vmatpush.msra.mxu0 0.0
        %714 = vmatpush.msra.mxu0 0.0
        %715 = vmatpush.msra.mxu0 0.0
        %716 = vmatpush.msra.mxu0 %v652
        %717 = vmatpush.msra.mxu0 %v651
        %718 = vmatmul.f32.gmra.mxu0 %v655
        %v719 = vpop.f32.mrf.mxu0
        %v720 = vadd.f32 0.0, %v719
        %721 = vmatmul.f32.gmra.mxu0 %v658
        %v722 = vpop.f32.mrf.mxu0
        %v723 = vadd.f32 0.0, %v722
        %724 = vmatmul.f32.gmra.mxu0 %v661
        %v725 = vpop.f32.mrf.mxu0
        %v726 = vadd.f32 0.0, %v725
        %727 = vmatmul.f32.gmra.mxu0 %v664
        %v728 = vpop.f32.mrf.mxu0
        %v729 = vadd.f32 0.0, %v728
        %730 = vmatmul.f32.gmra.mxu0 %v667
        %v731 = vpop.f32.mrf.mxu0
        %v732 = vadd.f32 0.0, %v731
        %733 = vmatmul.f32.gmra.mxu0 %v670
        %v734 = vpop.f32.mrf.mxu0
        %v735 = vadd.f32 0.0, %v734
        %736 = vmatmul.f32.gmra.mxu0 %v673
        %v737 = vpop.f32.mrf.mxu0
        %v738 = vadd.f32 0.0, %v737
        %739 = vmatmul.f32.gmra.mxu0 %v676
        %v740 = vpop.f32.mrf.mxu0
        %v741 = vadd.f32 0.0, %v740
        %742 = vmatmul.f32.gmra.mxu0 %v679
        %v743 = vpop.f32.mrf.mxu0
        %v744 = vadd.f32 0.0, %v743
        %745 = vmatmul.f32.gmra.mxu0 %v682
        %v746 = vpop.f32.mrf.mxu0
        %v747 = vadd.f32 0.0, %v746
        %748 = vmatmul.f32.gmra.mxu0 %v685
        %v749 = vpop.f32.mrf.mxu0
        %v750 = vadd.f32 0.0, %v749
        %751 = vmatmul.f32.gmra.mxu0 %v688
        %v752 = vpop.f32.mrf.mxu0
        %v753 = vadd.f32 0.0, %v752
        %754 = vmatmul.f32.gmra.mxu0 %v691
        %v755 = vpop.f32.mrf.mxu0
        %v756 = vadd.f32 0.0, %v755
        %757 = vmatmul.f32.gmra.mxu0 %v694
        %v758 = vpop.f32.mrf.mxu0
        %v759 = vadd.f32 0.0, %v758
        %760 = vmatmul.f32.gmra.mxu0 %v697
        %v761 = vpop.f32.mrf.mxu0
        %v762 = vadd.f32 0.0, %v761
        %763 = vmatmul.f32.gmra.mxu0 %v700
        %v764 = vpop.f32.mrf.mxu0
        %v765 = vadd.f32 0.0, %v764
        %766 = vdwg.mxu0
        %v768 = vsel %vm653, %v617, 0
        %v771 = vsel %vm653, %v618, 0
        %v774 = vsel %vm653, %v619, 0
        %v777 = vsel %vm653, %v620, 0
        %v780 = vsel %vm653, %v621, 0
        %v783 = vsel %vm653, %v622, 0
        %v786 = vsel %vm653, %v623, 0
        %v789 = vsel %vm653, %v624, 0
        %v792 = vsel %vm653, %v625, 0
        %v795 = vsel %vm653, %v626, 0
        %v798 = vsel %vm653, %v627, 0
        %v801 = vsel %vm653, %v628, 0
        %v804 = vsel %vm653, %v629, 0
        %v807 = vsel %vm653, %v630, 0
        %v810 = vsel %vm653, %v631, 0
        %v813 = vsel %vm653, %v632, 0
        %815 = vmatpush.msra.mxu0 0.0
        %816 = vmatpush.msra.mxu0 0.0
        %817 = vmatpush.msra.mxu0 0.0
        %818 = vmatpush.msra.mxu0 0.0
        %819 = vmatpush.msra.mxu0 0.0
        %820 = vmatpush.msra.mxu0 0.0
        %821 = vmatpush.msra.mxu0 0.0
        %822 = vmatpush.msra.mxu0 0.0
        %823 = vmatpush.msra.mxu0 0.0
        %824 = vmatpush.msra.mxu0 0.0
        %825 = vmatpush.msra.mxu0 0.0
        %826 = vmatpush.msra.mxu0 0.0
        %827 = vmatpush.msra.mxu0 0.0
        %828 = vmatpush.msra.mxu0 0.0
        %829 = vmatpush.msra.mxu0 %v634
        %830 = vmatpush.msra.mxu0 %v633
        %831 = vmatmul.f32.gmra.mxu0 %v768
        %v832 = vpop.f32.mrf.mxu0
        %v833 = vadd.f32 %v720, %v832
        %834 = vmatmul.f32.gmra.mxu0 %v771
        %v835 = vpop.f32.mrf.mxu0
        %v836 = vadd.f32 %v723, %v835
        %837 = vmatmul.f32.gmra.mxu0 %v774
        %v838 = vpop.f32.mrf.mxu0
        %v839 = vadd.f32 %v726, %v838
        %840 = vmatmul.f32.gmra.mxu0 %v777
        %v841 = vpop.f32.mrf.mxu0
        %v842 = vadd.f32 %v729, %v841
        %843 = vmatmul.f32.gmra.mxu0 %v780
        %v844 = vpop.f32.mrf.mxu0
        %v845 = vadd.f32 %v732, %v844
        %846 = vmatmul.f32.gmra.mxu0 %v783
        %v847 = vpop.f32.mrf.mxu0
        %v848 = vadd.f32 %v735, %v847
        %849 = vmatmul.f32.gmra.mxu0 %v786
        %v850 = vpop.f32.mrf.mxu0
        %v851 = vadd.f32 %v738, %v850
        %852 = vmatmul.f32.gmra.mxu0 %v789
        %v853 = vpop.f32.mrf.mxu0
        %v854 = vadd.f32 %v741, %v853
        %855 = vmatmul.f32.gmra.mxu0 %v792
        %v856 = vpop.f32.mrf.mxu0
        %v857 = vadd.f32 %v744, %v856
        %858 = vmatmul.f32.gmra.mxu0 %v795
        %v859 = vpop.f32.mrf.mxu0
        %v860 = vadd.f32 %v747, %v859
        %861 = vmatmul.f32.gmra.mxu0 %v798
        %v862 = vpop.f32.mrf.mxu0
        %v863 = vadd.f32 %v750, %v862
        %864 = vmatmul.f32.gmra.mxu0 %v801
        %v865 = vpop.f32.mrf.mxu0
        %v866 = vadd.f32 %v753, %v865
        %867 = vmatmul.f32.gmra.mxu0 %v804
        %v868 = vpop.f32.mrf.mxu0
        %v869 = vadd.f32 %v756, %v868
        %870 = vmatmul.f32.gmra.mxu0 %v807
        %v871 = vpop.f32.mrf.mxu0
        %v872 = vadd.f32 %v759, %v871
        %873 = vmatmul.f32.gmra.mxu0 %v810
        %v874 = vpop.f32.mrf.mxu0
        %v875 = vadd.f32 %v762, %v874
        %876 = vmatmul.f32.gmra.mxu0 %v813
        %v877 = vpop.f32.mrf.mxu0
        %v878 = vadd.f32 %v765, %v877
        %879 = vdwg.mxu0
        %v880 = vld [vmem:[%s6] sm:$0x1]
        %v882 = vperm.slane %v880, 0
        %v884 = vadd.f32 %v833, %v882
        %v885 = vadd.f32 %v836, %v882
        %v886 = vadd.f32 %v839, %v882
        %v887 = vadd.f32 %v842, %v882
        %v888 = vadd.f32 %v845, %v882
        %v889 = vadd.f32 %v848, %v882
        %v890 = vadd.f32 %v851, %v882
        %v891 = vadd.f32 %v854, %v882
        %v892 = vadd.f32 %v857, %v882
        %v893 = vadd.f32 %v860, %v882
        %v894 = vadd.f32 %v863, %v882
        %v895 = vadd.f32 %v866, %v882
        %v896 = vadd.f32 %v869, %v882
        %v897 = vadd.f32 %v872, %v882
        %v898 = vadd.f32 %v875, %v882
        %v899 = vadd.f32 %v878, %v882
        %v900 = vmax.f32 %v884, 0.0
        %v901 = vmax.f32 %v885, 0.0
        %v902 = vmax.f32 %v886, 0.0
        %v903 = vmax.f32 %v887, 0.0
        %v904 = vmax.f32 %v888, 0.0
        %v905 = vmax.f32 %v889, 0.0
        %v906 = vmax.f32 %v890, 0.0
        %v907 = vmax.f32 %v891, 0.0
        %v908 = vmax.f32 %v892, 0.0
        %v909 = vmax.f32 %v893, 0.0
        %v910 = vmax.f32 %v894, 0.0
        %v911 = vmax.f32 %v895, 0.0
        %v912 = vmax.f32 %v896, 0.0
        %v913 = vmax.f32 %v897, 0.0
        %v914 = vmax.f32 %v898, 0.0
        %v915 = vmax.f32 %v899, 0.0
        %916 = vst [vmem:[%s306] sm:$0xff] %v900
        %917 = vst [vmem:[%s306 + $0x8] sm:$0xff] %v901
        %918 = vst [vmem:[%s306 + $0x10] sm:$0xff] %v902
        %919 = vst [vmem:[%s306 + $0x18] sm:$0xff] %v903
        %920 = vst [vmem:[%s306 + $0x20] sm:$0xff] %v904
        %921 = vst [vmem:[%s306 + $0x28] sm:$0xff] %v905
        %922 = vst [vmem:[%s306 + $0x30] sm:$0xff] %v906
        %923 = vst [vmem:[%s306 + $0x38] sm:$0xff] %v907
        %924 = vst [vmem:[%s306 + $0x40] sm:$0xff] %v908
        %925 = vst [vmem:[%s306 + $0x48] sm:$0xff] %v909
        %926 = vst [vmem:[%s306 + $0x50] sm:$0xff] %v910
        %927 = vst [vmem:[%s306 + $0x58] sm:$0xff] %v911
        %928 = vst [vmem:[%s306 + $0x60] sm:$0xff] %v912
        %929 = vst [vmem:[%s306 + $0x68] sm:$0xff] %v913
        %930 = vst [vmem:[%s306 + $0x70] sm:$0xff] %v914
        %931 = vst [vmem:[%s306 + $0x78] sm:$0xff] %v915
        %s932 = sand.u32 %s191, 1
        %s933 = scalar_lea.sflag [#allocation3], %s932
        %s934 = sand.u32 %s191, 1
        %s935 = smul.addr %s934, 128
        %s936 = scalar_lea.vmem [#allocation2], %s935
        // Predicated region
        $region49: #{tpu_custom_call.1} parent=47 // pred_check
          %p937 = pneg %p201
        $region50: #{tpu_custom_call.1} parent=47 // pred_check_branch
          %939 = sbr.rel (%p937) target = $region52
        $region51: #{tpu_custom_call.1} parent=47 // pred_region
          %s940 = smul.u32 16, %s21
          %942 = vsyncadd %s933, 0
          %s943 = smul.addr %s940, 8
          %s944 = scalar_lea.hbm %s7, %s943
          %s945 = sshll.u32 %s936, 4
          %s946 = int_to_ptr.vmem [resolvable:$true] %s945
          %s947 = sshll.u32 %s944, 4
          %s948 = int_to_ptr.hbm [resolvable:$true] %s947
          %953 = dma.vmem_to_hbm [thread:$0]  %s946, 2048, %s948, %s933, 128, 128, 8
        $region52: #{tpu_custom_call.1} parent=47 // pred_fallthru
          _
      $region48: #{tpu_custom_call.1} parent=5 // pred_fallthru
        _
      %p954 = scmp.le.s32.totalorder 2, %s16
      // Predicated region
      $region53: #{tpu_custom_call.1} parent=5 // pred_check
        %p955 = pneg %p954
      $region54: #{tpu_custom_call.1} parent=5 // pred_check_branch
        %957 = sbr.rel (%p955) target = $region56
      $region55: #{tpu_custom_call.1} parent=5 // pred_region
        %s958 = ssub.s32 %s16, 2
        // Predicated region
        $region57: #{tpu_custom_call.1} parent=55 // pred_check
          %p959 = pneg %p207
        $region58: #{tpu_custom_call.1} parent=55 // pred_check_branch
          %961 = sbr.rel (%p959) target = $region60
        $region59: #{tpu_custom_call.1} parent=55 // pred_region
          %s962 = sand.u32 %s192, 1
          %s963 = scalar_lea.sflag [#allocation3], %s962
          %s964 = sand.u32 %s192, 1
          %s965 = smul.addr %s964, 128
          %s966 = scalar_lea.vmem [#allocation2], %s965
          %968 = dma.done %s963, 2048
        $region60: #{tpu_custom_call.1} parent=55 // pred_fallthru
          _
      $region56: #{tpu_custom_call.1} parent=5 // pred_fallthru
        _
    $region6: #{tpu_custom_call.1} parent=1 // loop_footer
      %s20 = sadd.s32 1, %s16
    $region7: #{tpu_custom_call.1} parent=1 // loop_footer_branch
      %15 = sbr.rel target = $region3
    $region8: #{tpu_custom_call.1} parent=1 // loop_exit
      _
    %969 = vsyncpa [#allocation3], 1
    %s970 = scalar_lea.sflag [#allocation3], 1
    %971 = vsyncpa %s970, 1

</llo_original>
